<compile_context>
chip_gen: v6e
topology: v6e:2x2x1
jax: 0.10.0
libtpu: 0.0.40
codegen_flags: <defaults>
</compile_context>

<pallas_src>
import functools

import jax
import jax.numpy as jnp
from jax.experimental import pallas as pl
from jax.experimental.pallas import tpu as pltpu


def _round_up(x, m):
    return ((x + m - 1) // m) * m


_TM_MAX = 512                    # batch (sublane) tile
_TN_MAX = 1024                   # output (lane) tile, multiple of 256 for v6e/v7x MXU
_VMEM_LIMIT = 32 * 1024 * 1024   # scoped VMEM budget: safe on v5e / v6e / v7x


# ------------------------------- kernels -----------------------------------


def _linear_kernel_single_k(x_ref, wt_ref, b_ref, o_ref):
    # Whole reduction dim resident in one tile: no accumulator scratch, write
    # the output tile directly.  x is cast to the (possibly bf16) weight dtype
    # at load so the MXU runs at bf16 rate; accumulate + bias-add stay f32
    # (safe on v5e, which has no bf16 VPU).
    x = x_ref[...].astype(wt_ref.dtype)
    acc = jnp.dot(x, wt_ref[...], preferred_element_type=jnp.float32)
    o_ref[...] = (acc + b_ref[...]).astype(o_ref.dtype)


def _linear_kernel_multi_k(x_ref, wt_ref, b_ref, o_ref, acc_ref):
    # Grid = (out_tiles, batch_tiles, k_tiles); K (reduction) is innermost.
    k = pl.program_id(2)

    @pl.when(k == 0)
    def _():
        acc_ref[...] = jnp.zeros_like(acc_ref)

    x = x_ref[...].astype(wt_ref.dtype)
    acc_ref[...] += jnp.dot(x, wt_ref[...], preferred_element_type=jnp.float32)

    @pl.when(k == pl.num_programs(2) - 1)
    def _():
        o_ref[...] = (acc_ref[...] + b_ref[...]).astype(o_ref.dtype)


# ---------------------------- tiling helpers --------------------------------


def _k_tile(k_padded, compute_dtype):
    # Keep the whole reduction resident when it fits the VMEM budget so the
    # weight tile never re-streams across batch tiles (n_k == 1).
    limit = 2048 if jnp.dtype(compute_dtype).itemsize <= 2 else 1024
    return k_padded if k_padded <= limit else limit


def _n_tile(n):
    return min(_TN_MAX, _round_up(n, 128))


# ------------------------------ parameters ----------------------------------


def prepare_params(weight, bias, *, compute_dtype=jnp.bfloat16):
    """One-time parameter prep (setup time, NOT per forward call).

    weight: (outputSize, inputSize) -> wt (Kp, Np) in `compute_dtype`
    bias:   (outputSize,)           -> b2 (1, Np)  in float32
    Tile-aligned padding of the weight/bias happens here, so the per-call
    forward never materializes a padded HBM copy of the weight.
    """
    weight = jnp.asarray(weight)
    bias = jnp.asarray(bias)
    n, k = weight.shape

    tn = _n_tile(n)
    np_pad = _round_up(n, tn)
    tk = _k_tile(k, compute_dtype)
    kp = _round_up(k, tk)

    wt = weight.T.astype(compute_dtype)
    if (kp, np_pad) != (k, n):
        wt = jnp.pad(wt, ((0, kp - k), (0, np_pad - n)))

    b2 = bias.reshape(1, -1).astype(jnp.float32)
    if np_pad != n:
        b2 = jnp.pad(b2, ((0, 0), (0, np_pad - n)))
    return wt, b2


# ------------------------------- forward ------------------------------------


@functools.partial(jax.jit, static_argnames=("out_features", "tm_max"))
def linear_forward_prepared(x, wt, b2, *, out_features, tm_max=_TM_MAX):
    """x @ W^T + b with a tiled Pallas TPU kernel (weights from prepare_params).

    x:  (B, inputSize) float32
    wt: (Kp, Np) compute-dtype weight (pre-transposed / padded)
    b2: (1, Np)  float32 bias row (padded)
    """
    B, K = x.shape
    Kp, Np = wt.shape
    assert b2.shape == (1, Np) and Kp >= K
    N = out_features
    assert N <= Np

    compute_dtype = wt.dtype
    tk = _k_tile(Kp, compute_dtype)
    assert Kp % tk == 0
    n_k = Kp // tk
    tn = min(_TN_MAX, Np)
    assert Np % tn == 0
    n_j = Np // tn

    # Balanced batch tiling: sublane-multiple tiles, minimal padding waste.
    n_bt = -(-B // tm_max)
    tm = _round_up(-(-B // n_bt), 8)
    n_i = _round_up(B, tm) // tm
    # v7x has 2 TensorCores: ensure >= 2 parallel tiles so both get work.
    if n_i * n_j == 1 and _round_up(B, 8) >= 16:
        tm = _round_up(-(-B // 2), 8)
        n_i = _round_up(B, tm) // tm
    Mp = n_i * tm

    # Per-call padding touches only x (rows, and K only when n_k > 1).
    if (Mp, Kp) != (B, K):
        x = jnp.pad(x, ((0, Mp - B), (0, Kp - K)))

    cost = pl.CostEstimate(
        flops=2 * Mp * Kp * Np,
        transcendentals=0,
        bytes_accessed=(Mp * Kp * x.dtype.itemsize
                        + Kp * Np * wt.dtype.itemsize
                        + Np * b2.dtype.itemsize
                        + Mp * Np * x.dtype.itemsize),
    )

    if n_k == 1:
        # Whole K resident: weight block index is constant across the batch
        # axis (inner grid dim) -> weight stays in VMEM while x/out stream.
        out_p = pl.pallas_call(
            _linear_kernel_single_k,
            out_shape=jax.ShapeDtypeStruct((Mp, Np), x.dtype),
            grid_spec=pltpu.PrefetchScalarGridSpec(
                num_scalar_prefetch=0,
                grid=(n_j, n_i),
                in_specs=[
                    pl.BlockSpec((tm, Kp), lambda j, i: (i, 0)),   # x tile
                    pl.BlockSpec((Kp, tn), lambda j, i: (0, j)),   # resident W
                    pl.BlockSpec((1, tn), lambda j, i: (0, j)),    # bias row
                ],
                out_specs=pl.BlockSpec((tm, tn), lambda j, i: (i, j)),
            ),
            compiler_params=pltpu.CompilerParams(
                dimension_semantics=("parallel", "parallel"),
                vmem_limit_bytes=_VMEM_LIMIT,
            ),
            cost_estimate=cost,
        )(x, wt, b2)
    else:
        out_p = pl.pallas_call(
            _linear_kernel_multi_k,
            out_shape=jax.ShapeDtypeStruct((Mp, Np), x.dtype),
            grid_spec=pltpu.PrefetchScalarGridSpec(
                num_scalar_prefetch=0,
                grid=(n_j, n_i, n_k),
                in_specs=[
                    pl.BlockSpec((tm, tk), lambda j, i, k: (i, k)),   # x tile
                    pl.BlockSpec((tk, tn), lambda j, i, k: (k, j)),   # W tile
                    pl.BlockSpec((1, tn), lambda j, i, k: (0, j)),    # bias row
                ],
                out_specs=pl.BlockSpec((tm, tn), lambda j, i, k: (i, j)),
                scratch_shapes=[pltpu.VMEM((tm, tn), jnp.float32)],
            ),
            compiler_params=pltpu.CompilerParams(
                dimension_semantics=("parallel", "parallel", "arbitrary"),
                vmem_limit_bytes=_VMEM_LIMIT,
            ),
            cost_estimate=cost,
        )(x, wt, b2)

    return out_p[:B, :N]


def linear_forward(x, weight, bias, *, compute_dtype=jnp.bfloat16):
    """Convenience wrapper matching nn.Linear's (out, in) weight layout."""
    wt, b2 = prepare_params(weight, bias, compute_dtype=compute_dtype)
    return linear_forward_prepared(x, wt, b2, out_features=weight.shape[0])


# --------------------------------- demo -------------------------------------


if __name__ == "__main__":
    key = jax.random.PRNGKey(0)

    def make_case(key, batch, input_size, output_size):
        kx, kw, kb = jax.random.split(key, 3)
        x = jax.random.normal(kx, (batch, input_size), dtype=jnp.float32)
        bound = 1.0 / (input_size ** 0.5)
        weight = jax.random.uniform(
            kw, (output_size, input_size), dtype=jnp.float32,
            minval=-bound, maxval=bound)
        bias = jax.random.uniform(
            kb, (output_size,), dtype=jnp.float32, minval=-bound, maxval=bound)
        return x, weight, bias

    # (batch, inputSize, outputSize, compute_dtype, atol, rtol)
    cases = [
        (8, 32, 16, jnp.float32, 1e-4, 1e-4),      # toy module shape, f32 MXU path
        (8, 32, 16, jnp.bfloat16, 5e-2, 5e-2),     # same shape, bf16 MXU path
        (100, 200, 48, jnp.bfloat16, 5e-2, 5e-2),  # unaligned shapes + 2-way batch split
        (64, 2500, 128, jnp.bfloat16, 5e-2, 5e-2), # K > k-tile -> multi-k accumulator path
    ]

    for idx, (b, i, o, cdt, atol, rtol) in enumerate(cases):
        key, sub = jax.random.split(key)
        x, weight, bias = make_case(sub, b, i, o)

        # Pre-transpose / pad / cast once (setup time), then run the kernel.
        wt, b2 = prepare_params(weight, bias, compute_dtype=cdt)
        out = linear_forward_prepared(x, wt, b2, out_features=o)
        jax.block_until_ready(out)

        ref = jnp.dot(x, weight.T, precision=jax.lax.Precision.HIGHEST) + bias
        assert out.shape == (b, o), f"bad output shape on case {idx}"
        assert bool(jnp.allclose(out, ref, atol=atol, rtol=rtol)), (
            f"mismatch on case {idx} ({b}x{i}->{o}, dtype={cdt})")

    print("KERNEL_OK")
</pallas_src>

<mosaic_0001>
module attributes {stable_mosaic.version = 11 : i64} {
  func.func @_linear_kernel_single_k(%arg0: i32, %arg1: i32, %arg2: memref<8x32xf32, #tpu.memory_space<vmem>>, %arg3: memref<32x128xf32, #tpu.memory_space<vmem>>, %arg4: memref<1x128xf32, #tpu.memory_space<vmem>>, %arg5: memref<8x128xf32, #tpu.memory_space<vmem>>) attributes {dimension_semantics = [#tpu.dimension_semantics<parallel>, #tpu.dimension_semantics<parallel>], iteration_bounds = array<i64: 1, 1>, scalar_prefetch = 0 : i64, scratch_operands = 0 : i64, tpu.core_type = #tpu.core_type<tc>, window_params = [{transform_indices = @transform_0, window_bounds = array<i64: 8, 32>}, {transform_indices = @transform_1, window_bounds = array<i64: 32, 128>}, {transform_indices = @transform_2, window_bounds = array<i64: 1, 128>}, {transform_indices = @transform_3, window_bounds = array<i64: 8, 128>}]} {
    %c0 = arith.constant 0 : index
    %c0_0 = arith.constant 0 : index
    %0 = vector.load %arg2[%c0, %c0_0] : memref<8x32xf32, #tpu.memory_space<vmem>>, vector<8x32xf32>
    %c0_1 = arith.constant 0 : index
    %c0_2 = arith.constant 0 : index
    %1 = vector.load %arg3[%c0_1, %c0_2] : memref<32x128xf32, #tpu.memory_space<vmem>>, vector<32x128xf32>
    %cst = arith.constant dense<0.000000e+00> : vector<8x128xf32>
    %2 = tpu.matmul %0, %1, %cst {dimension_numbers = #tpu.dot_dimension_numbers<[1], [0], [0], [1], [0, 0, 1, 1], [], []>} : vector<8x32xf32>, vector<32x128xf32>, vector<8x128xf32> -> vector<8x128xf32>
    %c0_3 = arith.constant 0 : index
    %c0_4 = arith.constant 0 : index
    %3 = vector.load %arg4[%c0_3, %c0_4] : memref<1x128xf32, #tpu.memory_space<vmem>>, vector<1x128xf32>
    %4 = vector.broadcast %3 : vector<1x128xf32> to vector<8x128xf32>
    %5 = arith.addf %2, %4 : vector<8x128xf32>
    %c0_5 = arith.constant 0 : index
    %c0_6 = arith.constant 0 : index
    %6 = vector.load %arg5[%c0_5, %c0_6] : memref<8x128xf32, #tpu.memory_space<vmem>>, vector<8x128xf32>
    tpu.vector_store %arg5[%c0_5, %c0_6], %5 {strides = array<i32>} : memref<8x128xf32, #tpu.memory_space<vmem>>, vector<8x128xf32>,
    return
  }
  func.func @transform_0(%arg0: i32, %arg1: i32) -> (i32, i32) {
    %c0_i32 = arith.constant 0 : i32
    %c0_i32_0 = arith.constant 0 : i32
    return %arg1, %c0_i32 : i32, i32
  }
  func.func @transform_1(%arg0: i32, %arg1: i32) -> (i32, i32) {
    %c0_i32 = arith.constant 0 : i32
    %c0_i32_0 = arith.constant 0 : i32
    return %c0_i32, %arg0 : i32, i32
  }
  func.func @transform_2(%arg0: i32, %arg1: i32) -> (i32, i32) {
    %c0_i32 = arith.constant 0 : i32
    %c0_i32_0 = arith.constant 0 : i32
    return %c0_i32, %arg0 : i32, i32
  }
  func.func @transform_3(%arg0: i32, %arg1: i32) -> (i32, i32) {
    %c0_i32 = arith.constant 0 : i32
    return %arg1, %arg0 : i32, i32
  }
}

</mosaic_0001>

<llo_original>
// kernel: linear_forward_prepared.1
$region0: #{linear_forward_prepared.1}
  #allocation0 [shape = 'u32[]', space=smem, size = 0x4, offset = 0x4, fixed_abs, tag = 'smem constant byte address 0x4 - core index']
  #allocation1 [shape = 'u32[144,128]{1,0:T(1,128)}', space=vmem, size = 0x12000, scoped, tag = 'internal scratch']
  %s0 = inlined_call_operand.hbm [shape: f32[8,32], index: 0, kind: input, shape index: {}]
  %s1 = inlined_call_operand.hbm [shape: f32[32,128], index: 1, kind: input, shape index: {}]
  %s2 = inlined_call_operand.vmem [shape: f32[1,128], index: 2, kind: input, shape index: {}]
  %s3 = inlined_call_operand.hbm [shape: f32[8,128], index: 3, kind: output, shape index: {}]
  %s4 = sld [smem:[#allocation0]]
  $region30: #{linear_forward_prepared.1} parent=0
    _
  %s6 = ssub.s32 1, %s4
  %s7 = scalar_select 0, %s6, %s4
  $region1: #{linear_forward_prepared.1} parent=0
    #allocation2 [shape = 'u8[4096]{0}', space=vmem, size = 0x1000, scoped, tag = 'input window, operand 0, single buffered']
    #allocation3 [shape = 's32[1]{0}', space=sflag, size = 0x4, scoped, tag = 'scoped memory for linear_forward_prepared.1']
    #allocation4 [shape = 's32[1]{0}', space=sflag, size = 0x4, scoped, tag = 'scoped memory for linear_forward_prepared.1']
    #allocation5 [shape = 'u8[16384]{0}', space=vmem, size = 0x4000, scoped, tag = 'input window, operand 1, single buffered']
    #allocation6 [shape = 's32[1]{0}', space=sflag, size = 0x4, scoped, tag = 'scoped memory for linear_forward_prepared.1']
    #allocation7 [shape = 'u8[4096]{0}', space=vmem, size = 0x1000, scoped, tag = 'output window, operand 0, single buffered']
    %8 = vsyncpa [#allocation3], 0
    %9 = vsyncpa [#allocation6], 0
    %10 = vsyncpa [#allocation4], 0
    // Predicated region
    $region2: #{linear_forward_prepared.1} parent=1 // pred_check
      _
    $region3: #{linear_forward_prepared.1} parent=1 // pred_check_branch
      %12 = sbr.rel (0) target = $region5
    $region4: #{linear_forward_prepared.1} parent=1 // pred_region
      %s14 = ssub.s32 128, 128
      %15 = vsyncadd [#allocation3], %s14
      %s17 = sshll.u32 [#allocation2], 4
      %s18 = int_to_ptr.vmem [resolvable:$true] %s17
      %20 = dma.hbm_to_vmem [thread:$0]  %s0, 128, %s18, [#allocation3]
    $region5: #{linear_forward_prepared.1} parent=1 // pred_fallthru
      _
    // Predicated region
    $region6: #{linear_forward_prepared.1} parent=1 // pred_check
      _
    $region7: #{linear_forward_prepared.1} parent=1 // pred_check_branch
      %22 = sbr.rel (0) target = $region9
    $region8: #{linear_forward_prepared.1} parent=1 // pred_region
      %s24 = ssub.s32 512, 512
      %25 = vsyncadd [#allocation6], %s24
      %s26 = sshll.u32 [#allocation5], 4
      %s27 = int_to_ptr.vmem [resolvable:$true] %s26
      %32 = dma.hbm_to_vmem [thread:$0]  %s1, 512, %s27, [#allocation6], 128, 128, 8
    $region9: #{linear_forward_prepared.1} parent=1 // pred_fallthru
      _
    // Predicated region
    $region10: #{linear_forward_prepared.1} parent=1 // pred_check
      _
    $region11: #{linear_forward_prepared.1} parent=1 // pred_check_branch
      %34 = sbr.rel (0) target = $region13
    $region12: #{linear_forward_prepared.1} parent=1 // pred_region
      _
    $region13: #{linear_forward_prepared.1} parent=1 // pred_fallthru
      _
    // Predicated region
    $region14: #{linear_forward_prepared.1} parent=1 // pred_check
      _
    $region15: #{linear_forward_prepared.1} parent=1 // pred_check_branch
      %36 = sbr.rel (0) target = $region17
    $region16: #{linear_forward_prepared.1} parent=1 // pred_region
      %37 = dma.done [#allocation3], 128
    $region17: #{linear_forward_prepared.1} parent=1 // pred_fallthru
      _
    // Predicated region
    $region18: #{linear_forward_prepared.1} parent=1 // pred_check
      _
    $region19: #{linear_forward_prepared.1} parent=1 // pred_check_branch
      %39 = sbr.rel (0) target = $region21
    $region20: #{linear_forward_prepared.1} parent=1 // pred_region
      %40 = dma.done [#allocation6], 512
    $region21: #{linear_forward_prepared.1} parent=1 // pred_fallthru
      _
    %v41 = vld [vmem:[#allocation2] sm:$0xff]
    %v42 = vld [vmem:[#allocation5] sm:$0xff]
    %v43 = vld [vmem:[#allocation5 + $0x8] sm:$0xff]
    %v44 = vld [vmem:[#allocation5 + $0x10] sm:$0xff]
    %v45 = vld [vmem:[#allocation5 + $0x18] sm:$0xff]
    %v46 = vld [vmem:[%s2] sm:$0x1]
    %v48 = vlaneseq
    %v49 = vshrl.u32 %v48, 7
    %v50 = vsub.s32 0, %v49
    %v51 = vrot.slane %v46, %v50
    %vm53 = vcmask 261120
    %v55 = vsel %vm53, %v41, 0
    %57 = vmatprep.subr.mxu0 0.0
    %58 = vmatpush1.msra.mxu0 0.0
    %59 = vmatprep.subr.mxu0 0.0
    %60 = vmatpush1.msra.mxu0 0.0
    %61 = vmatprep.subr.mxu0 0.0
    %62 = vmatpush1.msra.mxu0 0.0
    %63 = vmatprep.subr.mxu0 0.0
    %64 = vmatpush1.msra.mxu0 0.0
    %65 = vmatprep.subr.mxu0 0.0
    %66 = vmatpush1.msra.mxu0 0.0
    %67 = vmatprep.subr.mxu0 0.0
    %68 = vmatpush1.msra.mxu0 0.0
    %69 = vmatprep.subr.mxu0 0.0
    %70 = vmatpush1.msra.mxu0 0.0
    %71 = vmatprep.subr.mxu0 0.0
    %72 = vmatpush1.msra.mxu0 0.0
    %73 = vmatprep.subr.mxu0 0.0
    %74 = vmatpush1.msra.mxu0 0.0
    %75 = vmatprep.subr.mxu0 0.0
    %76 = vmatpush1.msra.mxu0 0.0
    %77 = vmatprep.subr.mxu0 0.0
    %78 = vmatpush1.msra.mxu0 0.0
    %79 = vmatprep.subr.mxu0 0.0
    %80 = vmatpush1.msra.mxu0 0.0
    %81 = vmatprep.subr.mxu0 0.0
    %82 = vmatpush1.msra.mxu0 %v45
    %83 = vmatprep.subr.mxu0 0.0
    %84 = vmatpush1.msra.mxu0 %v44
    %85 = vmatprep.subr.mxu0 0.0
    %86 = vmatpush1.msra.mxu0 %v43
    %87 = vmatprep.subr.mxu0 0.0
    %88 = vmatpush1.msra.mxu0 %v42
    %89 = vmatprep.subr.mxu0 0.0
    %90 = vmatpush2.msra.mxu0 0.0
    %91 = vmatprep.subr.mxu0 0.0
    %92 = vmatpush2.msra.mxu0 0.0
    %93 = vmatprep.subr.mxu0 0.0
    %94 = vmatpush2.msra.mxu0 0.0
    %95 = vmatprep.subr.mxu0 0.0
    %96 = vmatpush2.msra.mxu0 0.0
    %97 = vmatprep.subr.mxu0 0.0
    %98 = vmatpush2.msra.mxu0 0.0
    %99 = vmatprep.subr.mxu0 0.0
    %100 = vmatpush2.msra.mxu0 0.0
    %101 = vmatprep.subr.mxu0 0.0
    %102 = vmatpush2.msra.mxu0 0.0
    %103 = vmatprep.subr.mxu0 0.0
    %104 = vmatpush2.msra.mxu0 0.0
    %105 = vmatprep.subr.mxu0 0.0
    %106 = vmatpush2.msra.mxu0 0.0
    %107 = vmatprep.subr.mxu0 0.0
    %108 = vmatpush2.msra.mxu0 0.0
    %109 = vmatprep.subr.mxu0 0.0
    %110 = vmatpush2.msra.mxu0 0.0
    %111 = vmatprep.subr.mxu0 0.0
    %112 = vmatpush2.msra.mxu0 0.0
    %113 = vmatprep.subr.mxu0 0.0
    %114 = vmatpush2.msra.mxu0 0.0
    %115 = vmatprep.subr.mxu0 0.0
    %116 = vmatpush2.msra.mxu0 0.0
    %117 = vmatprep.subr.mxu0 0.0
    %118 = vmatpush2.msra.mxu0 0.0
    %119 = vmatprep.subr.mxu0 0.0
    %120 = vmatpush2.msra.mxu0 0.0
    %121 = vmatprep.mubr.f32.mxu0 0.0
    %122 = vmatmul.mubr.f32.gmra.mxu0 %v55
    %v123 = vpop.f32.mrf.mxu0
    %v124 = vadd.f32 %v51, %v123
    %v125 = vpop.f32.mrf.mxu0
    %126 = vdwg.mxu0
    %127 = vst [vmem:[#allocation7] sm:$0xff] %v124
    // Predicated region
    $region22: #{linear_forward_prepared.1} parent=1 // pred_check
      _
    $region23: #{linear_forward_prepared.1} parent=1 // pred_check_branch
      %129 = sbr.rel (0) target = $region25
    $region24: #{linear_forward_prepared.1} parent=1 // pred_region
      %s131 = ssub.s32 128, 128
      %132 = vsyncadd [#allocation4], %s131
      %s134 = sshll.u32 [#allocation7], 4
      %s135 = int_to_ptr.vmem [resolvable:$true] %s134
      %137 = dma.vmem_to_hbm [thread:$0]  %s135, 128, %s3, [#allocation4]
    $region25: #{linear_forward_prepared.1} parent=1 // pred_fallthru
      _
    // Predicated region
    $region26: #{linear_forward_prepared.1} parent=1 // pred_check
      _
    $region27: #{linear_forward_prepared.1} parent=1 // pred_check_branch
      %139 = sbr.rel (0) target = $region29
    $region28: #{linear_forward_prepared.1} parent=1 // pred_region
      %140 = dma.done [#allocation4], 128
    $region29: #{linear_forward_prepared.1} parent=1 // pred_fallthru
      _
    %141 = vsyncpa [#allocation3], 1
    %142 = vsyncpa [#allocation6], 1
    %143 = vsyncpa [#allocation4], 1

</llo_original>
